<compile_context>
chip_gen: v5e
topology: v5e:2x2
jax: 0.10.0
libtpu: 0.0.40
codegen_flags: <defaults>
</compile_context>

<pallas_src>
from functools import partial

import jax
import jax.numpy as jnp
from jax.experimental import pallas as pl
from jax.experimental.pallas import tpu as pltpu


def _round_up(v, m):
    return (v + m - 1) // m * m


def _vmem_capacity_bytes():
    """Physical VMEM of the attached TPU; conservative fallback (v7x per-TC)."""
    try:
        info = pltpu.get_tpu_info()
        for attr in ("vmem_capacity_bytes", "vmem_size_bytes", "vmem_bytes"):
            v = getattr(info, attr, None)
            if v:
                return int(v)
    except Exception:
        pass
    return 64 * 1024 * 1024


def _patch_embed_kernel(rows_ref, w_ref, add_ref, out_ref):
    # rows_ref: (k, S, K_pad) bf16 — token rows per batch (row 0 is zeros = cls slot)
    # w_ref:    (K_pad, E_pad) bf16 — flattened conv weight (pre-transposed, padded)
    # add_ref:  (S, E_pad)    f32  — row 0: class_token + pos[0]; rows 1..N: bias + pos
    # out_ref:  (k, S, E_pad) out_dtype (bf16 by default)
    w = w_ref[...]
    add = add_ref[...]
    k = rows_ref.shape[0]

    def body(b, carry):
        acc = jnp.dot(rows_ref[b], w, preferred_element_type=jnp.float32)  # (S, E_pad)
        out_ref[b] = (acc + add).astype(out_ref.dtype)
        return carry

    jax.lax.fori_loop(0, k, body, 0, unroll=min(2, k))


def prepare_params(conv_w, conv_b, class_token, pos_embed, patch_size):
    """One-time parameter prep (cache outside the per-forward hot path)."""
    E, C, P, _ = conv_w.shape
    assert P == patch_size
    K = C * P * P
    K_pad = _round_up(K, 128)
    E_pad = _round_up(E, 128)

    # Flattened conv weight, (K, E) ordered (c, p, q) to match patch flattening,
    # padded lane-dense on both contraction and output dims, bf16 for the MXU.
    w_mat = conv_w.reshape(E, K).T
    w_mat = jnp.pad(w_mat, ((0, K_pad - K), (0, E_pad - E))).astype(jnp.bfloat16)

    # Fused additive table: row 0 = class_token + pos[0]; rows 1..N = bias + pos.
    add = pos_embed[0]                                     # (S, E)
    add = add.at[1:, :].add(conv_b[None, :])
    add = add.at[0, :].add(class_token[0, 0])
    add = jnp.pad(add, ((0, 0), (0, E_pad - E))).astype(jnp.float32)  # (S, E_pad)
    return w_mat, add


@partial(jax.jit,
         static_argnames=("patch_size", "k", "B_pad", "vmem_limit", "out_dtype"))
def _forward_jit(x, w_mat, add, *, patch_size, k, B_pad, vmem_limit, out_dtype):
    B, C, H, W = x.shape
    P = patch_size
    nh, nw = H // P, W // P
    N = nh * nw
    S = N + 1
    K = C * P * P
    K_pad, E_pad = w_mat.shape

    # Patch extraction (fused XLA pass under jit); single pad fuses the zero
    # class-token row, the batch padding and the K lane padding.
    patches = x.reshape(B, C, nh, P, nw, P).transpose(0, 2, 4, 1, 3, 5)
    patches = patches.reshape(B, N, K).astype(jnp.bfloat16)
    rows = jnp.pad(patches, ((0, B_pad - B), (1, 0), (0, K_pad - K)))  # (B_pad, S, K_pad)

    grid = B_pad // k
    out_bytes = jnp.dtype(out_dtype).itemsize
    flops = 2 * B_pad * S * K_pad * E_pad
    bytes_accessed = (B_pad * S * K_pad * 2          # rows read (bf16)
                      + K_pad * E_pad * 2            # weight (bf16)
                      + S * E_pad * 4                # add table (f32)
                      + B_pad * S * E_pad * out_bytes)  # output write

    out = pl.pallas_call(
        _patch_embed_kernel,
        out_shape=jax.ShapeDtypeStruct((B_pad, S, E_pad), out_dtype),
        grid_spec=pltpu.PrefetchScalarGridSpec(
            num_scalar_prefetch=0,
            grid=(grid,),
            in_specs=[
                pl.BlockSpec((k, S, K_pad), lambda i: (i, 0, 0)),   # streaming rows
                pl.BlockSpec((K_pad, E_pad), lambda i: (0, 0)),     # resident weight
                pl.BlockSpec((S, E_pad), lambda i: (0, 0)),         # resident bias+pos+cls
            ],
            out_specs=pl.BlockSpec((k, S, E_pad), lambda i: (i, 0, 0)),
        ),
        compiler_params=pltpu.CompilerParams(
            dimension_semantics=("parallel",),
            vmem_limit_bytes=vmem_limit,
        ),
        cost_estimate=pl.CostEstimate(
            flops=flops, transcendentals=0, bytes_accessed=bytes_accessed),
    )(rows, w_mat, add)
    return out


def patch_embedding_forward(x, w_mat, add, *, patch_size, embed_dim,
                            out_dtype=jnp.bfloat16):
    """x: (B, C, H, W) float32. Returns (B, N+1, E) — same semantics as the module."""
    B, C, H, W = x.shape
    P = patch_size
    E = embed_dim
    assert H % P == 0 and W % P == 0, "H and W must be divisible by patch_size"
    nh, nw = H // P, W // P
    N = nh * nw
    S = N + 1
    K = C * P * P
    K_pad, E_pad = w_mat.shape
    assert K_pad == _round_up(K, 128) and add.shape == (S, E_pad)

    # ---- generation-aware tiling: size k from the VMEM budget ----------------
    vmem_cap = _vmem_capacity_bytes()
    vmem_limit = int(vmem_cap * 0.65)          # ~83 MiB on 128 MiB parts, ~41 MiB on v7x
    budget = int(vmem_limit * 0.85)            # headroom for compiler scratch

    out_bytes = jnp.dtype(out_dtype).itemsize
    resident = 2 * (K_pad * E_pad * 2 + S * E_pad * 4)              # weight + add (2x buf)
    per_batch = 2 * (S * K_pad * 2 + S * E_pad * out_bytes)         # rows + out, double-buf
    k = max(1, (budget - resident) // per_batch)
    k = int(min(k, B, 32))                      # keep per-step blocks in a sane range
    if B >= 2:
        k = min(k, (B + 1) // 2)                # >=2 grid steps -> both v7x TCs busy
    B_pad = _round_up(B, k)

    out = _forward_jit(x, w_mat, add, patch_size=P, k=k, B_pad=B_pad,
                       vmem_limit=vmem_limit, out_dtype=out_dtype)
    if B_pad > B:
        out = out[:B]
    return out if E_pad == E else out[..., :E]


if __name__ == "__main__":
    # Small, module-consistent shapes: img_size=16, patch_size=4,
    # in_channels=4, embed_dim=32, batch=2  -> N = (16//4)**2 = 16, S = 17.
    B, C, H, W = 2, 4, 16, 16
    P = 4
    E = 32
    N = (H // P) * (W // P)
    S = N + 1

    key = jax.random.PRNGKey(0)
    kx, kw, kb, kc, kp = jax.random.split(key, 5)

    x = jax.random.normal(kx, (B, C, H, W), dtype=jnp.float32)
    conv_w = jax.random.normal(kw, (E, C, P, P), dtype=jnp.float32) * 0.02
    conv_b = jax.random.normal(kb, (E,), dtype=jnp.float32) * 0.02
    # Module inits these to zeros; use small deterministic values so the
    # cls-row / pos-add paths are exercised non-trivially.
    class_token = jax.random.normal(kc, (1, 1, E), dtype=jnp.float32) * 0.02
    pos_embed = jax.random.normal(kp, (1, S, E), dtype=jnp.float32) * 0.02

    w_mat, add = prepare_params(conv_w, conv_b, class_token, pos_embed, P)
    out = patch_embedding_forward(x, w_mat, add, patch_size=P, embed_dim=E)
    out = jax.block_until_ready(out)

    # ---- reference (pure f32, module semantics) ----
    K = C * P * P
    patches_ref = x.reshape(B, C, H // P, P, W // P, P).transpose(0, 2, 4, 1, 3, 5)
    patches_ref = patches_ref.reshape(B, N, K)
    ref_patch = patches_ref @ conv_w.reshape(E, K).T + conv_b
    ref = jnp.concatenate(
        [jnp.broadcast_to(class_token, (B, 1, E)), ref_patch], axis=1) + pos_embed

    assert out.shape == (B, S, E), out.shape
    out_f32 = out.astype(jnp.float32)
    # Class-token row carries no matmul contribution -> only bf16 output rounding.
    cls_expected = (class_token[0, 0] + pos_embed[0, 0])[None, :]
    assert jnp.allclose(out_f32[:, 0, :], cls_expected, atol=2e-3)
    # bf16-operand / f32-accumulate matmul + bf16 output vs full-f32 reference.
    assert jnp.allclose(out_f32, ref, atol=2e-2, rtol=2e-2)

    print("KERNEL_OK")
</pallas_src>

<mosaic_0001>
module attributes {stable_mosaic.version = 11 : i64} {
  func.func @_patch_embed_kernel(%arg0: i32, %arg1: memref<1x17x128xbf16, #tpu.memory_space<vmem>>, %arg2: memref<128x128xbf16, #tpu.memory_space<vmem>>, %arg3: memref<17x128xf32, #tpu.memory_space<vmem>>, %arg4: memref<1x17x128xbf16, #tpu.memory_space<vmem>>) attributes {dimension_semantics = [#tpu.dimension_semantics<parallel>], iteration_bounds = array<i64: 2>, scalar_prefetch = 0 : i64, scratch_operands = 0 : i64, tpu.core_type = #tpu.core_type<tc>, window_params = [{transform_indices = @transform_0, window_bounds = array<i64: 1, 17, 128>}, {pipeline_mode = #tpu.pipeline_mode<synchronous>, transform_indices = @transform_1, window_bounds = array<i64: 128, 128>}, {pipeline_mode = #tpu.pipeline_mode<synchronous>, transform_indices = @transform_2, window_bounds = array<i64: 17, 128>}, {transform_indices = @transform_3, window_bounds = array<i64: 1, 17, 128>}]} {
    %c0 = arith.constant 0 : index
    %c0_0 = arith.constant 0 : index
    %0 = vector.load %arg2[%c0, %c0_0] : memref<128x128xbf16, #tpu.memory_space<vmem>>, vector<128x128xbf16>
    %c0_1 = arith.constant 0 : index
    %c0_2 = arith.constant 0 : index
    %1 = vector.load %arg3[%c0_1, %c0_2] : memref<17x128xf32, #tpu.memory_space<vmem>>, vector<17x128xf32>
    %c0_i32 = arith.constant 0 : i32
    %2 = arith.index_cast %c0_i32 : i32 to index
    %c0_3 = arith.constant 0 : index
    %c0_4 = arith.constant 0 : index
    %3 = vector.load %arg1[%2, %c0_3, %c0_4] : memref<1x17x128xbf16, #tpu.memory_space<vmem>>, vector<1x17x128xbf16>
    %4 = vector.shape_cast %3 : vector<1x17x128xbf16> to vector<17x128xbf16>
    %cst = arith.constant dense<0.000000e+00> : vector<17x128xf32>
    %5 = tpu.matmul %4, %0, %cst {dimension_numbers = #tpu.dot_dimension_numbers<[1], [0], [0], [1], [0, 0, 1, 1], [], []>} : vector<17x128xbf16>, vector<128x128xbf16>, vector<17x128xf32> -> vector<17x128xf32>
    %6 = arith.addf %5, %1 : vector<17x128xf32>
    %7 = arith.truncf %6 : vector<17x128xf32> to vector<17x128xbf16>
    %8 = arith.index_cast %c0_i32 : i32 to index
    %c0_5 = arith.constant 0 : index
    %c0_6 = arith.constant 0 : index
    %9 = vector.load %arg4[%8, %c0_5, %c0_6] : memref<1x17x128xbf16, #tpu.memory_space<vmem>>, vector<1x17x128xbf16>
    %10 = vector.shape_cast %9 : vector<1x17x128xbf16> to vector<17x128xbf16>
    %11 = vector.shape_cast %7 : vector<17x128xbf16> to vector<1x17x128xbf16>
    tpu.vector_store %arg4[%8, %c0_5, %c0_6], %11 {strides = array<i32>} : memref<1x17x128xbf16, #tpu.memory_space<vmem>>, vector<1x17x128xbf16>,
    %c1_i32 = arith.constant 1 : i32
    return
  }
  func.func @transform_0(%arg0: i32) -> (i32, i32, i32) {
    %c0_i32 = arith.constant 0 : i32
    %c0_i32_0 = arith.constant 0 : i32
    %c0_i32_1 = arith.constant 0 : i32
    return %arg0, %c0_i32, %c0_i32_0 : i32, i32, i32
  }
  func.func @transform_1(%arg0: i32) -> (i32, i32) {
    %c0_i32 = arith.constant 0 : i32
    %c0_i32_0 = arith.constant 0 : i32
    %c0_i32_1 = arith.constant 0 : i32
    return %c0_i32, %c0_i32_0 : i32, i32
  }
  func.func @transform_2(%arg0: i32) -> (i32, i32) {
    %c0_i32 = arith.constant 0 : i32
    %c0_i32_0 = arith.constant 0 : i32
    %c0_i32_1 = arith.constant 0 : i32
    return %c0_i32, %c0_i32_0 : i32, i32
  }
  func.func @transform_3(%arg0: i32) -> (i32, i32, i32) {
    %c0_i32 = arith.constant 0 : i32
    %c0_i32_0 = arith.constant 0 : i32
    %c0_i32_1 = arith.constant 0 : i32
    return %arg0, %c0_i32, %c0_i32_0 : i32, i32, i32
  }
}

</mosaic_0001>

<llo_original>
// kernel: _forward_jit.1
$region0: #{_forward_jit.1}
  #allocation0 [shape = 'u32[]', space=smem, size = 0x4, offset = 0x4, fixed_abs, tag = 'smem constant byte address 0x4 - core index']
  #allocation1 [shape = 'u32[72,128]{1,0:T(1,128)}', space=vmem, size = 0x9000, scoped, tag = 'internal scratch']
  %s0 = inlined_call_operand.vmem [shape: bf16[2,17,128], index: 0, kind: input, shape index: {}]
  %s1 = inlined_call_operand.vmem [shape: bf16[128,128], index: 1, kind: input, shape index: {}]
  %s2 = inlined_call_operand.vmem [shape: f32[17,128], index: 2, kind: input, shape index: {}]
  %s3 = inlined_call_operand.vmem [shape: bf16[2,17,128], index: 3, kind: output, shape index: {}]
  %s4 = sld [smem:[#allocation0]]
  $region45: #{_forward_jit.1} parent=0
    _
  %s6 = ssub.s32 1, %s4
  %s7 = scalar_select 0, %s6, %s4
  loop: start=0, step=1, limit=4
  $region2: #{_forward_jit.1} parent=0 // loop_pre_header
    _
  $region3: #{_forward_jit.1} parent=0 // loop_header
    %s9 = sphi 0, %s13
    %p10 = scmp.ge.s32.totalorder %s9, 4
    %s19 = sphi 0, %s21
    %s22 = sphi 0, %s19
    %s23 = sphi 0, %s22
    %s39 = sphi 0, %s23
    %s43 = sphi 0, %s43
    %s45 = sphi 0, %s43
    %s46 = sphi 0, %s45
    %s60 = sphi 0, %s46
    %s64 = sphi 0, %s64
    %s66 = sphi 0, %s64
    %s67 = sphi 0, %s66
    %s81 = sphi 0, %s67
    %s87 = sphi 0, %s89
    %s90 = sphi 0, %s87
    %s91 = sphi 0, %s90
    %s107 = sphi 0, %s91
  $region4: #{_forward_jit.1} parent=0 // loop_header_branch
    %12 = sbr.rel (%p10) target = $region8
  $region5: #{_forward_jit.1} parent=0 // loop_body
    %s14 = ssub.s32 %s9, 1
    %s15 = ssub.s32 %s9, 2
    %s16 = sadd.s32 %s9, 1
    %s17 = ssub.s32 %s9, %s16
    %p18 = scmp.eq.s32.totalorder %s17, 0
    %s20 = sadd.s32 %s19, 1
    %s21 = scalar_select %p18, %s19, %s20
    %p24 = pneg %p18
    %p25 = scmp.eq.s32.totalorder %s9, 1
    %p26 = por %p24, %p25
    %p27 = scmp.ne.s32.totalorder %s19, %s22
    %p28 = scmp.eq.s32.totalorder %s9, 0
    %p29 = por %p27, %p28
    %p30 = scmp.ne.s32.totalorder %s19, %s22
    %p31 = scmp.eq.s32.totalorder %s14, 1
    %p32 = por %p30, %p31
    %p33 = scmp.ne.s32.totalorder %s22, %s23
    %p34 = scmp.eq.s32.totalorder %s14, 0
    %p35 = por %p33, %p34
    %p36 = scmp.ne.s32.totalorder %s22, %s23
    %p37 = scmp.eq.s32.totalorder %s15, 1
    %p38 = por %p36, %p37
    %p40 = scmp.ne.s32.totalorder %s23, %s39
    %p41 = scmp.eq.s32.totalorder %s15, 0
    %p42 = por %p40, %p41
    %s44 = sadd.s32 %s43, 1
    %p47 = scmp.eq.s32.totalorder %s9, 1
    %p48 = scmp.ne.s32.totalorder %s43, %s45
    %p49 = scmp.eq.s32.totalorder %s9, 0
    %p50 = por %p48, %p49
    %p51 = scmp.ne.s32.totalorder %s43, %s45
    %p52 = scmp.eq.s32.totalorder %s14, 1
    %p53 = por %p51, %p52
    %p54 = scmp.ne.s32.totalorder %s45, %s46
    %p55 = scmp.eq.s32.totalorder %s14, 0
    %p56 = por %p54, %p55
    %p57 = scmp.ne.s32.totalorder %s45, %s46
    %p58 = scmp.eq.s32.totalorder %s15, 1
    %p59 = por %p57, %p58
    %p61 = scmp.ne.s32.totalorder %s46, %s60
    %p62 = scmp.eq.s32.totalorder %s15, 0
    %p63 = por %p61, %p62
    %s65 = sadd.s32 %s64, 1
    %p68 = scmp.eq.s32.totalorder %s9, 1
    %p69 = scmp.ne.s32.totalorder %s64, %s66
    %p70 = scmp.eq.s32.totalorder %s9, 0
    %p71 = por %p69, %p70
    %p72 = scmp.ne.s32.totalorder %s64, %s66
    %p73 = scmp.eq.s32.totalorder %s14, 1
    %p74 = por %p72, %p73
    %p75 = scmp.ne.s32.totalorder %s66, %s67
    %p76 = scmp.eq.s32.totalorder %s14, 0
    %p77 = por %p75, %p76
    %p78 = scmp.ne.s32.totalorder %s66, %s67
    %p79 = scmp.eq.s32.totalorder %s15, 1
    %p80 = por %p78, %p79
    %p82 = scmp.ne.s32.totalorder %s67, %s81
    %p83 = scmp.eq.s32.totalorder %s15, 0
    %p84 = por %p82, %p83
    %s85 = ssub.s32 %s9, %s16
    %p86 = scmp.eq.s32.totalorder %s85, 0
    %s88 = sadd.s32 %s87, 1
    %s89 = scalar_select %p86, %s87, %s88
    %p92 = pneg %p86
    %p93 = scmp.eq.s32.totalorder %s9, 1
    %p94 = por %p92, %p93
    %p95 = scmp.ne.s32.totalorder %s87, %s90
    %p96 = scmp.eq.s32.totalorder %s9, 0
    %p97 = por %p95, %p96
    %p98 = scmp.ne.s32.totalorder %s87, %s90
    %p99 = scmp.eq.s32.totalorder %s14, 1
    %p100 = por %p98, %p99
    %p101 = scmp.ne.s32.totalorder %s90, %s91
    %p102 = scmp.eq.s32.totalorder %s14, 0
    %p103 = por %p101, %p102
    %p104 = scmp.ne.s32.totalorder %s90, %s91
    %p105 = scmp.eq.s32.totalorder %s15, 1
    %p106 = por %p104, %p105
    %p108 = scmp.ne.s32.totalorder %s91, %s107
    %p109 = scmp.eq.s32.totalorder %s15, 0
    %p110 = por %p108, %p109
    %p111 = scmp.le.s32.totalorder 1, %s9
    %p112 = scmp.lt.s32.totalorder %s9, 3
    %p113 = pnand %p111, %p112
    %p114 = pneg %p113
    // Predicated region
    $region9: #{_forward_jit.1} parent=5 // pred_check
      _
    $region10: #{_forward_jit.1} parent=5 // pred_check_branch
      %116 = sbr.rel (%p113) target = $region12
    $region11: #{_forward_jit.1} parent=5 // pred_region
      %s117 = ssub.s32 %s9, 1
      // Predicated region
      $region13: #{_forward_jit.1} parent=11 // pred_check
        %p118 = pneg %p56
      $region14: #{_forward_jit.1} parent=11 // pred_check_branch
        %120 = sbr.rel (%p118) target = $region16
      $region15: #{_forward_jit.1} parent=11 // pred_region
        _
      $region16: #{_forward_jit.1} parent=11 // pred_fallthru
        _
      // Predicated region
      $region17: #{_forward_jit.1} parent=11 // pred_check
        %p121 = pneg %p77
      $region18: #{_forward_jit.1} parent=11 // pred_check_branch
        %123 = sbr.rel (%p121) target = $region20
      $region19: #{_forward_jit.1} parent=11 // pred_region
        _
      $region20: #{_forward_jit.1} parent=11 // pred_fallthru
        _
    $region12: #{_forward_jit.1} parent=5 // pred_fallthru
      _
    %p124 = scmp.lt.s32.totalorder %s9, 2
    // Predicated region
    $region21: #{_forward_jit.1} parent=5 // pred_check
      %p125 = pneg %p124
    $region22: #{_forward_jit.1} parent=5 // pred_check_branch
      %127 = sbr.rel (%p125) target = $region24
    $region23: #{_forward_jit.1} parent=5 // pred_region
      // Predicated region
      $region25: #{_forward_jit.1} parent=23 // pred_check
        %p128 = pneg %p29
      $region26: #{_forward_jit.1} parent=23 // pred_check_branch
        %130 = sbr.rel (%p128) target = $region28
      $region27: #{_forward_jit.1} parent=23 // pred_region
        %p131 = scmp.lt.s32.totalorder %s9, 1
        %s132 = scalar_select %p131, %s9, 1
        %s133 = smul.addr %s132, 3
        %s134 = smul.addr %s133, 4
        %s135 = scalar_lea.vmem %s0, %s134
      $region28: #{_forward_jit.1} parent=23 // pred_fallthru
        _
    $region24: #{_forward_jit.1} parent=5 // pred_fallthru
      _
    %p136 = scmp.le.s32.totalorder 1, %s9
    %p137 = scmp.lt.s32.totalorder %s9, 3
    %p138 = pnand %p136, %p137
    %p139 = pneg %p138
    // Predicated region
    $region29: #{_forward_jit.1} parent=5 // pred_check
      _
    $region30: #{_forward_jit.1} parent=5 // pred_check_branch
      %141 = sbr.rel (%p138) target = $region32
    $region31: #{_forward_jit.1} parent=5 // pred_region
      %s142 = ssub.s32 %s9, 1
      %p143 = scmp.lt.s32.totalorder %s14, 1
      %s144 = scalar_select %p143, %s14, 1
      %s145 = smul.addr %s144, 3
      %s146 = smul.addr %s145, 4
      %s147 = scalar_lea.vmem %s0, %s146
      %p148 = pneg %p35
      %p149 = pneg %p32
      %p150 = pneg %p56
      %p151 = pneg %p53
      %p152 = pneg %p77
      %p153 = pneg %p74
      %p154 = pneg %p103
      %p155 = pneg %p100
      %p156 = scmp.lt.s32.totalorder %s14, 1
      %s157 = scalar_select %p156, %s14, 1
      %s158 = smul.addr %s157, 3
      %s159 = smul.addr %s158, 4
      %s160 = scalar_lea.vmem %s3, %s159
      %p161 = scmp.lt.s32.totalorder %s14, 1
      %s162 = scalar_select %p161, %s14, 1
      %s163 = smul.addr %s162, 3
      %s164 = smul.addr %s163, 4
      %s165 = scalar_lea.vmem %s0, %s164
      %p166 = scmp.lt.s32.totalorder %s14, 1
      %s167 = scalar_select %p166, %s14, 1
      %s168 = smul.addr %s167, 3
      %s169 = smul.addr %s168, 4
      %s170 = scalar_lea.vmem %s3, %s169
      %v171 = vld [vmem:[%s1] sm:$0xf]
      %v172 = vld [vmem:[%s1 + $0x4] sm:$0xf]
      %v173 = vld [vmem:[%s1 + $0x8] sm:$0xf]
      %v174 = vld [vmem:[%s1 + $0xc] sm:$0xf]
      %v175 = vld [vmem:[%s1 + $0x10] sm:$0xf]
      %v176 = vld [vmem:[%s1 + $0x14] sm:$0xf]
      %v177 = vld [vmem:[%s1 + $0x18] sm:$0xf]
      %v178 = vld [vmem:[%s1 + $0x1c] sm:$0xf]
      %v179 = vld [vmem:[%s1 + $0x20] sm:$0xf]
      %v180 = vld [vmem:[%s1 + $0x24] sm:$0xf]
      %v181 = vld [vmem:[%s1 + $0x28] sm:$0xf]
      %v182 = vld [vmem:[%s1 + $0x2c] sm:$0xf]
      %v183 = vld [vmem:[%s1 + $0x30] sm:$0xf]
      %v184 = vld [vmem:[%s1 + $0x34] sm:$0xf]
      %v185 = vld [vmem:[%s1 + $0x38] sm:$0xf]
      %v186 = vld [vmem:[%s1 + $0x3c] sm:$0xf]
      %v187 = vld [vmem:[%s2] sm:$0xff]
      %v188 = vld [vmem:[%s2 + $0x8] sm:$0xff]
      %v189 = vld [vmem:[%s2 + $0x10] sm:$0x1]
      %v190 = vld [vmem:[%s165] sm:$0xf]
      %v191 = vld [vmem:[%s165 + $0x4] sm:$0xf]
      %v192 = vld [vmem:[%s165 + $0x8] sm:$0x1]
      %v196 = vunpack.c.l.b16 %v190
      %v197 = vunpack.c.l.b16 %v191
      %v198 = vunpack.c.l.b16 %v192
      %v199 = vpack.c.b16 %v197, %v196
      %v200 = vpack.c.b16 %v198, %v198
      %v219 = vunpack.c.l.b16 %v171
      %v220 = vunpack.c.l.b16 %v172
      %v221 = vunpack.c.l.b16 %v173
      %v222 = vunpack.c.l.b16 %v174
      %v223 = vunpack.c.l.b16 %v175
      %v224 = vunpack.c.l.b16 %v176
      %v225 = vunpack.c.l.b16 %v177
      %v226 = vunpack.c.l.b16 %v178
      %v227 = vunpack.c.l.b16 %v179
      %v228 = vunpack.c.l.b16 %v180
      %v229 = vunpack.c.l.b16 %v181
      %v230 = vunpack.c.l.b16 %v182
      %v231 = vunpack.c.l.b16 %v183
      %v232 = vunpack.c.l.b16 %v184
      %v233 = vunpack.c.l.b16 %v185
      %v234 = vunpack.c.l.b16 %v186
      %v235 = vpack.c.b16 %v220, %v219
      %v236 = vpack.c.b16 %v222, %v221
      %v237 = vpack.c.b16 %v224, %v223
      %v238 = vpack.c.b16 %v226, %v225
      %v239 = vpack.c.b16 %v228, %v227
      %v240 = vpack.c.b16 %v230, %v229
      %v241 = vpack.c.b16 %v232, %v231
      %v242 = vpack.c.b16 %v234, %v233
      %251 = vmatpush.bf16.msra.mxu0 %v242
      %252 = vmatpush.bf16.msra.mxu0 %v241
      %253 = vmatpush.bf16.msra.mxu0 %v240
      %254 = vmatpush.bf16.msra.mxu0 %v239
      %255 = vmatpush.bf16.msra.mxu0 %v238
      %256 = vmatpush.bf16.msra.mxu0 %v237
      %257 = vmatpush.bf16.msra.mxu0 %v236
      %258 = vmatpush.bf16.msra.mxu0 %v235
      %259 = vmatmul.bf16.gmra.mxu0 %v199
      %v260 = vpop.f32.mrf.mxu0
      %v261 = vadd.f32 %v187, %v260
      %v262 = vpop.f32.mrf.mxu0
      %v263 = vadd.f32 %v188, %v262
      %264 = vmatmul.bf16.gmra.mxu0 %v200
      %v265 = vpop.f32.mrf.mxu0
      %v266 = vadd.f32 %v189, %v265
      %v267 = vpop.f32.mrf.mxu0
      %268 = vdwg.mxu0
      %v269 = vpack.c.bf16 %v261, %v261
      %v270 = vpack.c.bf16 %v263, %v263
      %v271 = vpack.c.bf16 %v266, %v266
      %272 = vst [vmem:[%s170] sm:$0xf] %v269
      %273 = vst [vmem:[%s170 + $0x4] sm:$0xf] %v270
      %vm274 = vcmask 1040384
      %vm275 = vsmask.f32 256
      %vm276 = vmand %vm274, %vm275
      %v277 = vld [vmem:[%s170 + $0x8] sm:$0x1]
      %v278 = vsel %vm276, %v271, %v277
      %279 = vst [vmem:[%s170 + $0x8] sm:$0x1] %v278
      %p280 = scmp.lt.s32.totalorder %s14, 1
      %s281 = scalar_select %p280, %s14, 1
      %s282 = smul.addr %s281, 3
      %s283 = smul.addr %s282, 4
      %s284 = scalar_lea.vmem %s3, %s283
      // Predicated region
      $region33: #{_forward_jit.1} parent=31 // pred_check
        %p285 = pneg %p100
      $region34: #{_forward_jit.1} parent=31 // pred_check_branch
        %287 = sbr.rel (%p285) target = $region36
      $region35: #{_forward_jit.1} parent=31 // pred_region
        _
      $region36: #{_forward_jit.1} parent=31 // pred_fallthru
        _
    $region32: #{_forward_jit.1} parent=5 // pred_fallthru
      _
    %p288 = scmp.le.s32.totalorder 2, %s9
    // Predicated region
    $region37: #{_forward_jit.1} parent=5 // pred_check
      %p289 = pneg %p288
    $region38: #{_forward_jit.1} parent=5 // pred_check_branch
      %291 = sbr.rel (%p289) target = $region40
    $region39: #{_forward_jit.1} parent=5 // pred_region
      %s292 = ssub.s32 %s9, 2
      // Predicated region
      $region41: #{_forward_jit.1} parent=39 // pred_check
        %p293 = pneg %p106
      $region42: #{_forward_jit.1} parent=39 // pred_check_branch
        %295 = sbr.rel (%p293) target = $region44
      $region43: #{_forward_jit.1} parent=39 // pred_region
        %p296 = scmp.lt.s32.totalorder %s15, 1
        %s297 = scalar_select %p296, %s15, 1
        %s298 = smul.addr %s297, 3
        %s299 = smul.addr %s298, 4
        %s300 = scalar_lea.vmem %s3, %s299
      $region44: #{_forward_jit.1} parent=39 // pred_fallthru
        _
    $region40: #{_forward_jit.1} parent=5 // pred_fallthru
      _
  $region6: #{_forward_jit.1} parent=0 // loop_footer
    %s13 = sadd.s32 1, %s9
  $region7: #{_forward_jit.1} parent=0 // loop_footer_branch
    %8 = sbr.rel target = $region3
  $region8: #{_forward_jit.1} parent=0 // loop_exit
    _

</llo_original>
